<compile_context>
chip_gen: v5e
topology: v5e:2x2
jax: 0.10.0
libtpu: 0.0.40
codegen_flags: <defaults>
</compile_context>

<pallas_src>
import functools
import math

import numpy as np

import jax
import jax.numpy as jnp
from jax.experimental import pallas as pl
from jax.experimental.pallas import tpu as pltpu

# Lane layout of the per-batch-row partial sums in the (1, 128) output row.
_CE_NUM = 0      # sum_q w(q) * nll(q)
_CE_DEN = 1      # sum_q w(q)
_CARD_PRED = 2   # number of queries predicted as foreground
_TGT_LEN = 3     # number of matched targets in this image
_LOW = 4         # sum_q |pred_lower - tgt_lower| (matched queries)
_UP = 5          # sum_q |pred_upper - tgt_upper|
_POLY0 = 6       # per-coefficient poly L1 sums occupy lanes 6 .. 6+(P-2)-1


def _criterion_kernel(logits_ref, cls_ref, pred_ref, tgt_ref, out_ref,
                      stack_ref, *, eos_coef):
    f32 = jnp.float32
    logits = logits_ref[...].astype(f32)            # [TB, K, Q]
    TB, K, Q = logits.shape
    no_obj = K - 1
    cls = cls_ref[...]                              # [TB, 1, Q] int32

    # Match mask derived in-kernel: padded / unmatched queries carry the
    # no-object class id (asserted on the host side).
    mask = (cls != no_obj).astype(f32)              # [TB, 1, Q]

    # ---- shared foreground / no-object stats (static sublane slices) -------
    fg = logits[:, :no_obj, :]                      # [TB, K-1, Q]
    noobj = logits[:, no_obj:, :]                   # [TB, 1, Q]
    m_fg = jnp.max(fg, axis=1, keepdims=True)       # [TB, 1, Q]
    m = jnp.maximum(m_fg, noobj)                    # softmax max

    # ---- class-weighted NLL (log-softmax over the K sublanes) --------------
    z = logits - m                                  # [TB, K, Q]
    lse = jnp.log(jnp.sum(jnp.exp(z), axis=1, keepdims=True))     # [TB, 1, Q]
    kio = jax.lax.broadcasted_iota(jnp.int32, (TB, K, Q), 1)
    z_cls = jnp.sum(jnp.where(kio == cls, z, 0.0), axis=1, keepdims=True)
    nll = lse - z_cls                               # [TB, 1, Q]
    w = jnp.where(cls == no_obj, f32(eos_coef), f32(1.0))          # [TB, 1, Q]
    is_fg = (m_fg >= noobj).astype(f32)             # [TB, 1, Q]

    # ---- masked L1 on curve parameters --------------------------------------
    # TODO(synk): LSTR samples the polynomial at gt y-points; here the L1 is
    # taken directly on the curve coefficients.
    diff = jnp.abs(pred_ref[...].astype(f32) - tgt_ref[...].astype(f32)) * mask

    # ---- single fused cross-lane reduction -----------------------------------
    # Stage every per-query row into one VMEM tile so ONE XLU lane-reduce
    # covers all partial sums (ce num/den, cardinality, tgt_len, low/up/poly).
    stack_ref[:, _CE_NUM:_CE_NUM + 1, :] = w * nll
    stack_ref[:, _CE_DEN:_CE_DEN + 1, :] = w
    stack_ref[:, _CARD_PRED:_CARD_PRED + 1, :] = is_fg
    stack_ref[:, _TGT_LEN:_TGT_LEN + 1, :] = mask
    stack_ref[:, _LOW:, :] = diff                   # rows 4 .. 4+P-1
    sums = jnp.sum(stack_ref[...], axis=-1, keepdims=True)   # [TB, 4+P, 1]

    # ---- one lane-dense (TB,1,128) store of all partials --------------------
    n_rows = stack_ref.shape[1]
    lane = jax.lax.broadcasted_iota(jnp.int32, (TB, 1, 128), 2)
    out = jnp.zeros((TB, 1, 128), f32)
    for r in range(n_rows):
        out = out + jnp.where(lane == r, sums[:, r:r + 1, :], f32(0.0))
    out_ref[...] = out


@functools.partial(jax.jit, static_argnames=("eos_coef",))
def _criterion_device(pred_logits, pred_curves, target_classes, tgt_curves_pq,
                      loss_weights, *, eos_coef):
    """pred_logits [B,Q,K], pred_curves [B,Q,P] (f32 or bf16);
    target_classes int32 [B,1,Q]; tgt_curves_pq [B,P,Q]."""
    B, Q, K = pred_logits.shape
    P = pred_curves.shape[-1]

    # Layout plumbing (folded into this jit): big dim (Q) -> lanes, tiny dims
    # (K, P) -> sublanes.
    logits_kq = jnp.transpose(pred_logits, (0, 2, 1))        # [B, K, Q]
    pred_pq = jnp.transpose(pred_curves, (0, 2, 1))          # [B, P, Q]

    # Batch rows per grid step: keep >=2 grid steps when possible so v7x's two
    # TensorCores both get work; on v5e/v6e (1 TC) a single big step is fine.
    G = 2 if (B >= 2 and B % 2 == 0) else 1
    TB = B // G

    grid_spec = pltpu.PrefetchScalarGridSpec(
        num_scalar_prefetch=0,
        grid=(G,),
        in_specs=[
            pl.BlockSpec((TB, K, Q), lambda g: (g, 0, 0)),
            pl.BlockSpec((TB, 1, Q), lambda g: (g, 0, 0)),
            pl.BlockSpec((TB, P, Q), lambda g: (g, 0, 0)),
            pl.BlockSpec((TB, P, Q), lambda g: (g, 0, 0)),
        ],
        out_specs=pl.BlockSpec((TB, 1, 128), lambda g: (g, 0, 0)),
        scratch_shapes=[pltpu.VMEM((TB, 4 + P, Q), jnp.float32)],
    )

    parts = pl.pallas_call(
        functools.partial(_criterion_kernel, eos_coef=eos_coef),
        out_shape=jax.ShapeDtypeStruct((B, 1, 128), jnp.float32),
        grid_spec=grid_spec,
        compiler_params=pltpu.CompilerParams(
            dimension_semantics=("parallel",)),
    )(logits_kq, target_classes, pred_pq, tgt_curves_pq)

    # Tiny epilogue (same executable): combine per-batch partial sums.
    p = parts[:, 0, :]                                        # [B, 128]
    loss_ce = jnp.sum(p[:, _CE_NUM]) / jnp.sum(p[:, _CE_DEN])
    loss_card = jnp.sum(jnp.abs(p[:, _CARD_PRED] - p[:, _TGT_LEN])) / B
    num_boxes = jnp.maximum(jnp.sum(p[:, _TGT_LEN]), 1.0)
    loss_lowers = jnp.sum(p[:, _LOW]) / num_boxes
    loss_uppers = jnp.sum(p[:, _UP]) / num_boxes
    loss_polys = jnp.sum(p[:, _POLY0:_POLY0 + max(P - 2, 0)]) / num_boxes

    loss_dict = {
        'loss_ce': loss_ce,
        'loss_cardinality': loss_card,
        'loss_lowers': loss_lowers,
        'loss_uppers': loss_uppers,
        'loss_polys': loss_polys,
    }
    # Loss-weight multiply kept inside the jit (review item).
    w_ce, w_low, w_up, w_poly = loss_weights
    scaled = {
        'loss_ce': loss_ce * w_ce,
        'loss_lowers': loss_lowers * w_low,
        'loss_uppers': loss_uppers * w_up,
        'loss_polys': loss_polys * w_poly,
    }
    total = scaled['loss_ce'] + scaled['loss_lowers'] + \
        scaled['loss_uppers'] + scaled['loss_polys']
    return loss_dict, scaled, total


def _prepare_targets(gt_cluxy, Q, P, num_classes):
    """Pad per-image gt once on the host (single transfer per array) instead
    of a per-image device scatter loop.
    # TODO(synk): in a training loop cache / pre-pad targets on device to
    # avoid this per-step numpy loop + H2D transfers."""
    B = len(gt_cluxy)
    classes = np.full((B, 1, Q), num_classes, np.int32)
    tgt_pq = np.zeros((B, P, Q), np.float32)
    for b, gt in enumerate(gt_cluxy):
        g = np.asarray(gt, dtype=np.float32)
        n = min(int(g.shape[0]), Q)
        if n > 0:
            lbl = g[:n, 0].astype(np.int32)
            # The kernel derives the match mask as (class != no-object), so no
            # gt class may collide with the no-object id.
            assert np.all((lbl >= 0) & (lbl < num_classes)), \
                "gt class id collides with the no-object class"
            classes[b, 0, :n] = lbl
            tgt_pq[b, :, :n] = g[:n, 1:1 + P].T
    return jnp.asarray(classes), jnp.asarray(tgt_pq)


class AELoss:
    """JAX/Pallas re-implementation of LICA's AELoss forward pass."""

    def __init__(self, db=None, debug_path=None, aux_loss=None,
                 num_classes=None, dec_layers=None):
        self.db = db
        self.debug_path = debug_path
        self.num_classes = num_classes
        # Exactly as in the reference module: all loss weights are zero.
        self.weight_dict = {'loss_ce': 0.0, 'loss_polys': 0.0,
                            'loss_lowers': 0.0, 'loss_uppers': 0.0}
        if aux_loss:
            aux = {}
            for i in range(dec_layers - 1):
                aux.update({k + f'_{i}': v for k, v in self.weight_dict.items()})
            self.weight_dict.update(aux)
        self.eos_coef = 1.0
        # SetCriterion's empty_weight buffer (kept for parity; the kernel
        # derives the per-query weight from the class index directly).
        self.empty_weight = jnp.ones((num_classes + 1,),
                                     jnp.float32).at[-1].set(self.eos_coef)

    def forward(self, iteration, save, viz_split, outputs, targets):
        # targets[0] = viz images (unused); targets[1:] = per-image gt, each of
        # shape (1, N_i, 1+P): column 0 = class label, columns 1.. = curve params.
        gt_cluxy = [tgt[0] for tgt in targets[1:]]

        pred_logits = outputs['pred_logits']          # [B, Q, K]
        pred_curves = outputs['pred_boxes']           # [B, Q, P]
        B, Q, K = pred_logits.shape
        P = pred_curves.shape[-1]

        # Matcher: all matching-cost weights in this module are 0, so the
        # Hungarian cost matrix is identically zero and any permutation is
        # optimal; use the identity assignment (query i <-> target i).
        # TODO(synk): full Hungarian matching (scipy.linear_sum_assignment)
        # has no clean Pallas/TPU equivalent.
        target_classes, tgt_curves_pq = _prepare_targets(
            gt_cluxy, Q, P, self.num_classes)

        loss_weights = (self.weight_dict['loss_ce'],
                        self.weight_dict['loss_lowers'],
                        self.weight_dict['loss_uppers'],
                        self.weight_dict['loss_polys'])

        loss_dict, scaled_dict, total = _criterion_device(
            pred_logits, pred_curves, target_classes, tgt_curves_pq,
            loss_weights, eos_coef=self.eos_coef)

        losses = total
        # reduce_dict: single-process world -> identity.
        loss_dict_reduced = dict(loss_dict)
        loss_dict_reduced_unscaled = {f'{k}_unscaled': v
                                      for k, v in loss_dict_reduced.items()}
        loss_dict_reduced_scaled = dict(scaled_dict)
        losses_reduced_scaled = total
        # TODO(synk): this .item()-style host sync is mandated by the reference
        # semantics but dominates per-step wall-clock; make it periodic/async
        # in a production training loop.
        loss_value = float(losses_reduced_scaled)
        if not math.isfinite(loss_value):
            print('Loss is {}, stopping training'.format(loss_value))
            print(loss_dict_reduced)
            raise SystemExit(1)

        # TODO(synk): the `save` branch (softmax/argmax + save_debug_images_boxes
        # visualization dump) is host-side debug I/O with no kernel equivalent.
        return (losses, loss_dict_reduced, loss_dict_reduced_unscaled,
                loss_dict_reduced_scaled, loss_value)

    __call__ = forward


if __name__ == "__main__":
    key = jax.random.PRNGKey(0)
    B, Q, num_classes, P = 2, 16, 4, 8
    K = num_classes + 1

    k1, k2, k3, k4 = jax.random.split(key, 4)
    outputs = {
        'pred_logits': jax.random.normal(k1, (B, Q, K), jnp.float32),
        'pred_boxes': jax.random.normal(k2, (B, Q, P), jnp.float32),
    }

    # targets[0]: viz images (unused); targets[1:]: per-image gt (1, N_i, 1+P).
    n_per_img = [3, 2]
    targets = [jax.random.normal(k3, (B, 3, 32, 32), jnp.float32)]
    gkeys = jax.random.split(k4, B)
    for b, n in enumerate(n_per_img):
        lk, pk = jax.random.split(gkeys[b])
        labels = jax.random.randint(lk, (n, 1), 0, num_classes).astype(jnp.float32)
        params = jax.random.normal(pk, (n, P), jnp.float32)
        targets.append(jnp.concatenate([labels, params], axis=-1)[None])

    crit = AELoss(db=None, debug_path=None, aux_loss=True,
                  num_classes=num_classes, dec_layers=2)
    (losses, loss_dict_reduced, loss_dict_reduced_unscaled,
     loss_dict_reduced_scaled, loss_value) = crit(0, False, 'train',
                                                  outputs, targets)

    jax.block_until_ready(losses)
    for v in loss_dict_reduced.values():
        jax.block_until_ready(v)
    assert math.isfinite(loss_value)
    for v in loss_dict_reduced.values():
        assert bool(jnp.isfinite(v))
    print("KERNEL_OK")
</pallas_src>

<mosaic_0001>
module attributes {stable_mosaic.version = 11 : i64} {
  func.func @_criterion_kernel(%arg0: i32, %arg1: memref<1x5x16xf32, #tpu.memory_space<vmem>>, %arg2: memref<1x1x16xi32, #tpu.memory_space<vmem>>, %arg3: memref<1x8x16xf32, #tpu.memory_space<vmem>>, %arg4: memref<1x8x16xf32, #tpu.memory_space<vmem>>, %arg5: memref<1x1x128xf32, #tpu.memory_space<vmem>>, %arg6: memref<1x12x16xf32, #tpu.memory_space<vmem>>) attributes {dimension_semantics = [#tpu.dimension_semantics<parallel>], iteration_bounds = array<i64: 2>, scalar_prefetch = 0 : i64, scratch_operands = 1 : i64, tpu.core_type = #tpu.core_type<tc>, window_params = [{transform_indices = @transform_0, window_bounds = array<i64: 1, 5, 16>}, {transform_indices = @transform_1, window_bounds = array<i64: 1, 1, 16>}, {transform_indices = @transform_2, window_bounds = array<i64: 1, 8, 16>}, {transform_indices = @transform_3, window_bounds = array<i64: 1, 8, 16>}, {transform_indices = @transform_4, window_bounds = array<i64: 1, 1, 128>}]} {
    %c0 = arith.constant 0 : index
    %c0_0 = arith.constant 0 : index
    %c0_1 = arith.constant 0 : index
    %0 = vector.load %arg1[%c0, %c0_0, %c0_1] : memref<1x5x16xf32, #tpu.memory_space<vmem>>, vector<1x5x16xf32>
    %c0_2 = arith.constant 0 : index
    %c0_3 = arith.constant 0 : index
    %c0_4 = arith.constant 0 : index
    %1 = vector.load %arg2[%c0_2, %c0_3, %c0_4] : memref<1x1x16xi32, #tpu.memory_space<vmem>>, vector<1x1x16xi32>
    %c4_i32 = arith.constant 4 : i32
    %2 = vector.broadcast %c4_i32 : i32 to vector<1x1x16xi32>
    %3 = arith.cmpi ne, %1, %2 : vector<1x1x16xi32>
    %4 = arith.extui %3 : vector<1x1x16xi1> to vector<1x1x16xi32>
    %5 = arith.sitofp %4 : vector<1x1x16xi32> to vector<1x1x16xf32>
    %6 = vector.extract_strided_slice %0 {offsets = [0, 0, 0], sizes = [1, 4, 16], strides = [1, 1, 1]} : vector<1x5x16xf32> to vector<1x4x16xf32>
    %7 = vector.extract_strided_slice %0 {offsets = [0, 4, 0], sizes = [1, 1, 16], strides = [1, 1, 1]} : vector<1x5x16xf32> to vector<1x1x16xf32>
    %cst = arith.constant dense<0xFF800000> : vector<1x16xf32>
    %8 = vector.multi_reduction <maximumf>, %6, %cst [1] : vector<1x4x16xf32> to vector<1x16xf32>
    %9 = vector.shape_cast %8 : vector<1x16xf32> to vector<1x1x16xf32>
    %10 = arith.maximumf %9, %7 : vector<1x1x16xf32>
    %11 = vector.broadcast %10 : vector<1x1x16xf32> to vector<1x5x16xf32>
    %12 = arith.subf %0, %11 : vector<1x5x16xf32>
    %13 = math.exp %12 : vector<1x5x16xf32>
    %cst_5 = arith.constant dense<0.000000e+00> : vector<1x16xf32>
    %14 = vector.multi_reduction <add>, %13, %cst_5 [1] : vector<1x5x16xf32> to vector<1x16xf32>
    %15 = vector.shape_cast %14 : vector<1x16xf32> to vector<1x1x16xf32>
    %16 = math.log %15 : vector<1x1x16xf32>
    %17 = tpu.iota {dimensions = array<i32: 1>} : vector<1x5x16xi32>
    %18 = vector.broadcast %1 : vector<1x1x16xi32> to vector<1x5x16xi32>
    %19 = arith.cmpi eq, %17, %18 : vector<1x5x16xi32>
    %cst_6 = arith.constant 0.000000e+00 : f32
    %20 = vector.broadcast %cst_6 : f32 to vector<1x5x16xf32>
    %21 = arith.select %19, %12, %20 : vector<1x5x16xi1>, vector<1x5x16xf32>
    %cst_7 = arith.constant dense<0.000000e+00> : vector<1x16xf32>
    %22 = vector.multi_reduction <add>, %21, %cst_7 [1] : vector<1x5x16xf32> to vector<1x16xf32>
    %23 = vector.shape_cast %22 : vector<1x16xf32> to vector<1x1x16xf32>
    %24 = arith.subf %16, %23 : vector<1x1x16xf32>
    %c4_i32_8 = arith.constant 4 : i32
    %25 = vector.broadcast %c4_i32_8 : i32 to vector<1x1x16xi32>
    %26 = arith.cmpi eq, %1, %25 : vector<1x1x16xi32>
    %cst_9 = arith.constant 1.000000e+00 : f32
    %cst_10 = arith.constant 1.000000e+00 : f32
    %27 = vector.broadcast %cst_9 : f32 to vector<1x1x16xf32>
    %28 = vector.broadcast %cst_10 : f32 to vector<1x1x16xf32>
    %29 = arith.select %26, %27, %28 : vector<1x1x16xi1>, vector<1x1x16xf32>
    %30 = arith.cmpf oge, %9, %7 : vector<1x1x16xf32>
    %31 = arith.extui %30 : vector<1x1x16xi1> to vector<1x1x16xi32>
    %32 = arith.sitofp %31 : vector<1x1x16xi32> to vector<1x1x16xf32>
    %c0_11 = arith.constant 0 : index
    %c0_12 = arith.constant 0 : index
    %c0_13 = arith.constant 0 : index
    %33 = vector.load %arg3[%c0_11, %c0_12, %c0_13] : memref<1x8x16xf32, #tpu.memory_space<vmem>>, vector<1x8x16xf32>
    %c0_14 = arith.constant 0 : index
    %c0_15 = arith.constant 0 : index
    %c0_16 = arith.constant 0 : index
    %34 = vector.load %arg4[%c0_14, %c0_15, %c0_16] : memref<1x8x16xf32, #tpu.memory_space<vmem>>, vector<1x8x16xf32>
    %35 = arith.subf %33, %34 : vector<1x8x16xf32>
    %36 = math.absf %35 : vector<1x8x16xf32>
    %37 = vector.broadcast %5 : vector<1x1x16xf32> to vector<1x8x16xf32>
    %38 = arith.mulf %36, %37 : vector<1x8x16xf32>
    %39 = arith.mulf %29, %24 : vector<1x1x16xf32>
    %c0_17 = arith.constant 0 : index
    %c0_18 = arith.constant 0 : index
    %c0_19 = arith.constant 0 : index
    %40 = vector.load %arg6[%c0_17, %c0_18, %c0_19] : memref<1x12x16xf32, #tpu.memory_space<vmem>>, vector<1x1x16xf32>
    tpu.vector_store %arg6[%c0_17, %c0_18, %c0_19], %39 {strides = array<i32>} : memref<1x12x16xf32, #tpu.memory_space<vmem>>, vector<1x1x16xf32>,
    %c0_20 = arith.constant 0 : index
    %c1 = arith.constant 1 : index
    %c0_21 = arith.constant 0 : index
    %41 = vector.load %arg6[%c0_20, %c1, %c0_21] : memref<1x12x16xf32, #tpu.memory_space<vmem>>, vector<1x1x16xf32>
    tpu.vector_store %arg6[%c0_20, %c1, %c0_21], %29 {strides = array<i32>} : memref<1x12x16xf32, #tpu.memory_space<vmem>>, vector<1x1x16xf32>,
    %c0_22 = arith.constant 0 : index
    %c2 = arith.constant 2 : index
    %c0_23 = arith.constant 0 : index
    %42 = vector.load %arg6[%c0_22, %c2, %c0_23] : memref<1x12x16xf32, #tpu.memory_space<vmem>>, vector<1x1x16xf32>
    tpu.vector_store %arg6[%c0_22, %c2, %c0_23], %32 {strides = array<i32>} : memref<1x12x16xf32, #tpu.memory_space<vmem>>, vector<1x1x16xf32>,
    %c0_24 = arith.constant 0 : index
    %c3 = arith.constant 3 : index
    %c0_25 = arith.constant 0 : index
    %43 = vector.load %arg6[%c0_24, %c3, %c0_25] : memref<1x12x16xf32, #tpu.memory_space<vmem>>, vector<1x1x16xf32>
    tpu.vector_store %arg6[%c0_24, %c3, %c0_25], %5 {strides = array<i32>} : memref<1x12x16xf32, #tpu.memory_space<vmem>>, vector<1x1x16xf32>,
    %c0_26 = arith.constant 0 : index
    %c4 = arith.constant 4 : index
    %c0_27 = arith.constant 0 : index
    %44 = vector.load %arg6[%c0_26, %c4, %c0_27] : memref<1x12x16xf32, #tpu.memory_space<vmem>>, vector<1x8x16xf32>
    tpu.vector_store %arg6[%c0_26, %c4, %c0_27], %38 {strides = array<i32>} : memref<1x12x16xf32, #tpu.memory_space<vmem>>, vector<1x8x16xf32>,
    %c0_28 = arith.constant 0 : index
    %c0_29 = arith.constant 0 : index
    %c0_30 = arith.constant 0 : index
    %45 = vector.load %arg6[%c0_28, %c0_29, %c0_30] : memref<1x12x16xf32, #tpu.memory_space<vmem>>, vector<1x12x16xf32>
    %cst_31 = arith.constant dense<0.000000e+00> : vector<1x12xf32>
    %46 = vector.multi_reduction <add>, %45, %cst_31 [2] : vector<1x12x16xf32> to vector<1x12xf32>
    %47 = vector.shape_cast %46 : vector<1x12xf32> to vector<1x12x1xf32>
    %48 = tpu.iota {dimensions = array<i32: 2>} : vector<1x1x128xi32>
    %cst_32 = arith.constant 0.000000e+00 : f32
    %49 = vector.broadcast %cst_32 : f32 to vector<1x1x128xf32>
    %c0_i32 = arith.constant 0 : i32
    %50 = vector.broadcast %c0_i32 : i32 to vector<1x1x128xi32>
    %51 = arith.cmpi eq, %48, %50 : vector<1x1x128xi32>
    %52 = vector.extract_strided_slice %47 {offsets = [0, 0, 0], sizes = [1, 1, 1], strides = [1, 1, 1]} : vector<1x12x1xf32> to vector<1x1x1xf32>
    %cst_33 = arith.constant 0.000000e+00 : f32
    %53 = vector.shape_cast %52 : vector<1x1x1xf32> to vector<1x1x1xf32>
    %54 = vector.broadcast %53 : vector<1x1x1xf32> to vector<1x1x128xf32>
    %55 = vector.broadcast %cst_33 : f32 to vector<1x1x128xf32>
    %56 = arith.select %51, %54, %55 : vector<1x1x128xi1>, vector<1x1x128xf32>
    %57 = arith.addf %49, %56 : vector<1x1x128xf32>
    %c1_i32 = arith.constant 1 : i32
    %58 = vector.broadcast %c1_i32 : i32 to vector<1x1x128xi32>
    %59 = arith.cmpi eq, %48, %58 : vector<1x1x128xi32>
    %60 = vector.extract_strided_slice %47 {offsets = [0, 1, 0], sizes = [1, 1, 1], strides = [1, 1, 1]} : vector<1x12x1xf32> to vector<1x1x1xf32>
    %cst_34 = arith.constant 0.000000e+00 : f32
    %61 = vector.shape_cast %60 : vector<1x1x1xf32> to vector<1x1x1xf32>
    %62 = vector.broadcast %61 : vector<1x1x1xf32> to vector<1x1x128xf32>
    %63 = vector.broadcast %cst_34 : f32 to vector<1x1x128xf32>
    %64 = arith.select %59, %62, %63 : vector<1x1x128xi1>, vector<1x1x128xf32>
    %65 = arith.addf %57, %64 : vector<1x1x128xf32>
    %c2_i32 = arith.constant 2 : i32
    %66 = vector.broadcast %c2_i32 : i32 to vector<1x1x128xi32>
    %67 = arith.cmpi eq, %48, %66 : vector<1x1x128xi32>
    %68 = vector.extract_strided_slice %47 {offsets = [0, 2, 0], sizes = [1, 1, 1], strides = [1, 1, 1]} : vector<1x12x1xf32> to vector<1x1x1xf32>
    %cst_35 = arith.constant 0.000000e+00 : f32
    %69 = vector.shape_cast %68 : vector<1x1x1xf32> to vector<1x1x1xf32>
    %70 = vector.broadcast %69 : vector<1x1x1xf32> to vector<1x1x128xf32>
    %71 = vector.broadcast %cst_35 : f32 to vector<1x1x128xf32>
    %72 = arith.select %67, %70, %71 : vector<1x1x128xi1>, vector<1x1x128xf32>
    %73 = arith.addf %65, %72 : vector<1x1x128xf32>
    %c3_i32 = arith.constant 3 : i32
    %74 = vector.broadcast %c3_i32 : i32 to vector<1x1x128xi32>
    %75 = arith.cmpi eq, %48, %74 : vector<1x1x128xi32>
    %76 = vector.extract_strided_slice %47 {offsets = [0, 3, 0], sizes = [1, 1, 1], strides = [1, 1, 1]} : vector<1x12x1xf32> to vector<1x1x1xf32>
    %cst_36 = arith.constant 0.000000e+00 : f32
    %77 = vector.shape_cast %76 : vector<1x1x1xf32> to vector<1x1x1xf32>
    %78 = vector.broadcast %77 : vector<1x1x1xf32> to vector<1x1x128xf32>
    %79 = vector.broadcast %cst_36 : f32 to vector<1x1x128xf32>
    %80 = arith.select %75, %78, %79 : vector<1x1x128xi1>, vector<1x1x128xf32>
    %81 = arith.addf %73, %80 : vector<1x1x128xf32>
    %c4_i32_37 = arith.constant 4 : i32
    %82 = vector.broadcast %c4_i32_37 : i32 to vector<1x1x128xi32>
    %83 = arith.cmpi eq, %48, %82 : vector<1x1x128xi32>
    %84 = vector.extract_strided_slice %47 {offsets = [0, 4, 0], sizes = [1, 1, 1], strides = [1, 1, 1]} : vector<1x12x1xf32> to vector<1x1x1xf32>
    %cst_38 = arith.constant 0.000000e+00 : f32
    %85 = vector.shape_cast %84 : vector<1x1x1xf32> to vector<1x1x1xf32>
    %86 = vector.broadcast %85 : vector<1x1x1xf32> to vector<1x1x128xf32>
    %87 = vector.broadcast %cst_38 : f32 to vector<1x1x128xf32>
    %88 = arith.select %83, %86, %87 : vector<1x1x128xi1>, vector<1x1x128xf32>
    %89 = arith.addf %81, %88 : vector<1x1x128xf32>
    %c5_i32 = arith.constant 5 : i32
    %90 = vector.broadcast %c5_i32 : i32 to vector<1x1x128xi32>
    %91 = arith.cmpi eq, %48, %90 : vector<1x1x128xi32>
    %92 = vector.extract_strided_slice %47 {offsets = [0, 5, 0], sizes = [1, 1, 1], strides = [1, 1, 1]} : vector<1x12x1xf32> to vector<1x1x1xf32>
    %cst_39 = arith.constant 0.000000e+00 : f32
    %93 = vector.shape_cast %92 : vector<1x1x1xf32> to vector<1x1x1xf32>
    %94 = vector.broadcast %93 : vector<1x1x1xf32> to vector<1x1x128xf32>
    %95 = vector.broadcast %cst_39 : f32 to vector<1x1x128xf32>
    %96 = arith.select %91, %94, %95 : vector<1x1x128xi1>, vector<1x1x128xf32>
    %97 = arith.addf %89, %96 : vector<1x1x128xf32>
    %c6_i32 = arith.constant 6 : i32
    %98 = vector.broadcast %c6_i32 : i32 to vector<1x1x128xi32>
    %99 = arith.cmpi eq, %48, %98 : vector<1x1x128xi32>
    %100 = vector.extract_strided_slice %47 {offsets = [0, 6, 0], sizes = [1, 1, 1], strides = [1, 1, 1]} : vector<1x12x1xf32> to vector<1x1x1xf32>
    %cst_40 = arith.constant 0.000000e+00 : f32
    %101 = vector.shape_cast %100 : vector<1x1x1xf32> to vector<1x1x1xf32>
    %102 = vector.broadcast %101 : vector<1x1x1xf32> to vector<1x1x128xf32>
    %103 = vector.broadcast %cst_40 : f32 to vector<1x1x128xf32>
    %104 = arith.select %99, %102, %103 : vector<1x1x128xi1>, vector<1x1x128xf32>
    %105 = arith.addf %97, %104 : vector<1x1x128xf32>
    %c7_i32 = arith.constant 7 : i32
    %106 = vector.broadcast %c7_i32 : i32 to vector<1x1x128xi32>
    %107 = arith.cmpi eq, %48, %106 : vector<1x1x128xi32>
    %108 = vector.extract_strided_slice %47 {offsets = [0, 7, 0], sizes = [1, 1, 1], strides = [1, 1, 1]} : vector<1x12x1xf32> to vector<1x1x1xf32>
    %cst_41 = arith.constant 0.000000e+00 : f32
    %109 = vector.shape_cast %108 : vector<1x1x1xf32> to vector<1x1x1xf32>
    %110 = vector.broadcast %109 : vector<1x1x1xf32> to vector<1x1x128xf32>
    %111 = vector.broadcast %cst_41 : f32 to vector<1x1x128xf32>
    %112 = arith.select %107, %110, %111 : vector<1x1x128xi1>, vector<1x1x128xf32>
    %113 = arith.addf %105, %112 : vector<1x1x128xf32>
    %c8_i32 = arith.constant 8 : i32
    %114 = vector.broadcast %c8_i32 : i32 to vector<1x1x128xi32>
    %115 = arith.cmpi eq, %48, %114 : vector<1x1x128xi32>
    %116 = vector.extract_strided_slice %47 {offsets = [0, 8, 0], sizes = [1, 1, 1], strides = [1, 1, 1]} : vector<1x12x1xf32> to vector<1x1x1xf32>
    %cst_42 = arith.constant 0.000000e+00 : f32
    %117 = vector.shape_cast %116 : vector<1x1x1xf32> to vector<1x1x1xf32>
    %118 = vector.broadcast %117 : vector<1x1x1xf32> to vector<1x1x128xf32>
    %119 = vector.broadcast %cst_42 : f32 to vector<1x1x128xf32>
    %120 = arith.select %115, %118, %119 : vector<1x1x128xi1>, vector<1x1x128xf32>
    %121 = arith.addf %113, %120 : vector<1x1x128xf32>
    %c9_i32 = arith.constant 9 : i32
    %122 = vector.broadcast %c9_i32 : i32 to vector<1x1x128xi32>
    %123 = arith.cmpi eq, %48, %122 : vector<1x1x128xi32>
    %124 = vector.extract_strided_slice %47 {offsets = [0, 9, 0], sizes = [1, 1, 1], strides = [1, 1, 1]} : vector<1x12x1xf32> to vector<1x1x1xf32>
    %cst_43 = arith.constant 0.000000e+00 : f32
    %125 = vector.shape_cast %124 : vector<1x1x1xf32> to vector<1x1x1xf32>
    %126 = vector.broadcast %125 : vector<1x1x1xf32> to vector<1x1x128xf32>
    %127 = vector.broadcast %cst_43 : f32 to vector<1x1x128xf32>
    %128 = arith.select %123, %126, %127 : vector<1x1x128xi1>, vector<1x1x128xf32>
    %129 = arith.addf %121, %128 : vector<1x1x128xf32>
    %c10_i32 = arith.constant 10 : i32
    %130 = vector.broadcast %c10_i32 : i32 to vector<1x1x128xi32>
    %131 = arith.cmpi eq, %48, %130 : vector<1x1x128xi32>
    %132 = vector.extract_strided_slice %47 {offsets = [0, 10, 0], sizes = [1, 1, 1], strides = [1, 1, 1]} : vector<1x12x1xf32> to vector<1x1x1xf32>
    %cst_44 = arith.constant 0.000000e+00 : f32
    %133 = vector.shape_cast %132 : vector<1x1x1xf32> to vector<1x1x1xf32>
    %134 = vector.broadcast %133 : vector<1x1x1xf32> to vector<1x1x128xf32>
    %135 = vector.broadcast %cst_44 : f32 to vector<1x1x128xf32>
    %136 = arith.select %131, %134, %135 : vector<1x1x128xi1>, vector<1x1x128xf32>
    %137 = arith.addf %129, %136 : vector<1x1x128xf32>
    %c11_i32 = arith.constant 11 : i32
    %138 = vector.broadcast %c11_i32 : i32 to vector<1x1x128xi32>
    %139 = arith.cmpi eq, %48, %138 : vector<1x1x128xi32>
    %140 = vector.extract_strided_slice %47 {offsets = [0, 11, 0], sizes = [1, 1, 1], strides = [1, 1, 1]} : vector<1x12x1xf32> to vector<1x1x1xf32>
    %cst_45 = arith.constant 0.000000e+00 : f32
    %141 = vector.shape_cast %140 : vector<1x1x1xf32> to vector<1x1x1xf32>
    %142 = vector.broadcast %141 : vector<1x1x1xf32> to vector<1x1x128xf32>
    %143 = vector.broadcast %cst_45 : f32 to vector<1x1x128xf32>
    %144 = arith.select %139, %142, %143 : vector<1x1x128xi1>, vector<1x1x128xf32>
    %145 = arith.addf %137, %144 : vector<1x1x128xf32>
    %c0_46 = arith.constant 0 : index
    %c0_47 = arith.constant 0 : index
    %c0_48 = arith.constant 0 : index
    %146 = vector.load %arg5[%c0_46, %c0_47, %c0_48] : memref<1x1x128xf32, #tpu.memory_space<vmem>>, vector<1x1x128xf32>
    tpu.vector_store %arg5[%c0_46, %c0_47, %c0_48], %145 {strides = array<i32>} : memref<1x1x128xf32, #tpu.memory_space<vmem>>, vector<1x1x128xf32>,
    return
  }
  func.func @transform_0(%arg0: i32) -> (i32, i32, i32) {
    %c0_i32 = arith.constant 0 : i32
    %c0_i32_0 = arith.constant 0 : i32
    %c0_i32_1 = arith.constant 0 : i32
    return %arg0, %c0_i32, %c0_i32_0 : i32, i32, i32
  }
  func.func @transform_1(%arg0: i32) -> (i32, i32, i32) {
    %c0_i32 = arith.constant 0 : i32
    %c0_i32_0 = arith.constant 0 : i32
    %c0_i32_1 = arith.constant 0 : i32
    return %arg0, %c0_i32, %c0_i32_0 : i32, i32, i32
  }
  func.func @transform_2(%arg0: i32) -> (i32, i32, i32) {
    %c0_i32 = arith.constant 0 : i32
    %c0_i32_0 = arith.constant 0 : i32
    %c0_i32_1 = arith.constant 0 : i32
    return %arg0, %c0_i32, %c0_i32_0 : i32, i32, i32
  }
  func.func @transform_3(%arg0: i32) -> (i32, i32, i32) {
    %c0_i32 = arith.constant 0 : i32
    %c0_i32_0 = arith.constant 0 : i32
    %c0_i32_1 = arith.constant 0 : i32
    return %arg0, %c0_i32, %c0_i32_0 : i32, i32, i32
  }
  func.func @transform_4(%arg0: i32) -> (i32, i32, i32) {
    %c0_i32 = arith.constant 0 : i32
    %c0_i32_0 = arith.constant 0 : i32
    %c0_i32_1 = arith.constant 0 : i32
    return %arg0, %c0_i32, %c0_i32_0 : i32, i32, i32
  }
}

</mosaic_0001>

<llo_original>
// kernel: _criterion_device.1
$region0: #{_criterion_device.1}
  #allocation0 [shape = 'u32[]', space=smem, size = 0x4, offset = 0x4, fixed_abs, tag = 'smem constant byte address 0x4 - core index']
  #allocation1 [shape = 'u32[72,128]{1,0:T(1,128)}', space=vmem, size = 0x9000, scoped, tag = 'internal scratch']
  #allocation2 [shape = 'f32[1,12,16]{2,1,0:T(8,128)}', space=vmem, size = 0x2000, scoped, tag = 'scratch operand']
  %s0 = inlined_call_operand.vmem [shape: f32[2,5,16], index: 0, kind: input, shape index: {}]
  %s1 = inlined_call_operand.vmem [shape: s32[2,1,16], index: 1, kind: input, shape index: {}]
  %s2 = inlined_call_operand.vmem [shape: f32[2,8,16], index: 2, kind: input, shape index: {}]
  %s3 = inlined_call_operand.hbm [shape: f32[2,8,16], index: 3, kind: input, shape index: {}]
  %s4 = inlined_call_operand.vmem [shape: f32[2,1,128], index: 4, kind: output, shape index: {}]
  %s5 = sld [smem:[#allocation0]]
  $region53: #{_criterion_device.1} parent=0
    _
  %s7 = ssub.s32 1, %s5
  %s8 = scalar_select 0, %s7, %s5
  $region1: #{_criterion_device.1} parent=0
    #allocation3 [shape = 'u8[8192]{0}', space=vmem, size = 0x2000, scoped, tag = 'input window, operand 3']
    #allocation4 [shape = 's32[2]{0}', space=sflag, size = 0x8, scoped, tag = 'scoped memory for _criterion_device.1']
    %9 = vsyncpa [#allocation4], 0
    %s10 = scalar_lea.sflag [#allocation4], 1
    %11 = vsyncpa %s10, 0
    loop: start=0, step=1, limit=4
    $region2: #{_criterion_device.1} parent=1 // loop_pre_header
      _
    $region3: #{_criterion_device.1} parent=1 // loop_header
      %s13 = sphi 0, %s17
      %p14 = scmp.ge.s32.totalorder %s13, 4
      %s23 = sphi 0, %s25
      %s26 = sphi 0, %s23
      %s27 = sphi 0, %s26
      %s43 = sphi 0, %s27
      %s49 = sphi 0, %s51
      %s52 = sphi 0, %s49
      %s53 = sphi 0, %s52
      %s69 = sphi 0, %s53
      %s75 = sphi 0, %s77
      %s78 = sphi 0, %s75
      %s79 = sphi 0, %s78
      %s95 = sphi 0, %s79
      %s101 = sphi 0, %s103
      %s104 = sphi 0, %s101
      %s105 = sphi 0, %s104
      %s121 = sphi 0, %s105
      %s127 = sphi 0, %s129
      %s130 = sphi 0, %s127
      %s131 = sphi 0, %s130
      %s147 = sphi 0, %s131
    $region4: #{_criterion_device.1} parent=1 // loop_header_branch
      %16 = sbr.rel (%p14) target = $region8
    $region5: #{_criterion_device.1} parent=1 // loop_body
      %s18 = ssub.s32 %s13, 1
      %s19 = ssub.s32 %s13, 2
      %s20 = sadd.s32 %s13, 1
      %s21 = ssub.s32 %s13, %s20
      %p22 = scmp.eq.s32.totalorder %s21, 0
      %s24 = sadd.s32 %s23, 1
      %s25 = scalar_select %p22, %s23, %s24
      %p28 = pneg %p22
      %p29 = scmp.eq.s32.totalorder %s13, 1
      %p30 = por %p28, %p29
      %p31 = scmp.ne.s32.totalorder %s23, %s26
      %p32 = scmp.eq.s32.totalorder %s13, 0
      %p33 = por %p31, %p32
      %p34 = scmp.ne.s32.totalorder %s23, %s26
      %p35 = scmp.eq.s32.totalorder %s18, 1
      %p36 = por %p34, %p35
      %p37 = scmp.ne.s32.totalorder %s26, %s27
      %p38 = scmp.eq.s32.totalorder %s18, 0
      %p39 = por %p37, %p38
      %p40 = scmp.ne.s32.totalorder %s26, %s27
      %p41 = scmp.eq.s32.totalorder %s19, 1
      %p42 = por %p40, %p41
      %p44 = scmp.ne.s32.totalorder %s27, %s43
      %p45 = scmp.eq.s32.totalorder %s19, 0
      %p46 = por %p44, %p45
      %s47 = ssub.s32 %s13, %s20
      %p48 = scmp.eq.s32.totalorder %s47, 0
      %s50 = sadd.s32 %s49, 1
      %s51 = scalar_select %p48, %s49, %s50
      %p54 = pneg %p48
      %p55 = scmp.eq.s32.totalorder %s13, 1
      %p56 = por %p54, %p55
      %p57 = scmp.ne.s32.totalorder %s49, %s52
      %p58 = scmp.eq.s32.totalorder %s13, 0
      %p59 = por %p57, %p58
      %p60 = scmp.ne.s32.totalorder %s49, %s52
      %p61 = scmp.eq.s32.totalorder %s18, 1
      %p62 = por %p60, %p61
      %p63 = scmp.ne.s32.totalorder %s52, %s53
      %p64 = scmp.eq.s32.totalorder %s18, 0
      %p65 = por %p63, %p64
      %p66 = scmp.ne.s32.totalorder %s52, %s53
      %p67 = scmp.eq.s32.totalorder %s19, 1
      %p68 = por %p66, %p67
      %p70 = scmp.ne.s32.totalorder %s53, %s69
      %p71 = scmp.eq.s32.totalorder %s19, 0
      %p72 = por %p70, %p71
      %s73 = ssub.s32 %s13, %s20
      %p74 = scmp.eq.s32.totalorder %s73, 0
      %s76 = sadd.s32 %s75, 1
      %s77 = scalar_select %p74, %s75, %s76
      %p80 = pneg %p74
      %p81 = scmp.eq.s32.totalorder %s13, 1
      %p82 = por %p80, %p81
      %p83 = scmp.ne.s32.totalorder %s75, %s78
      %p84 = scmp.eq.s32.totalorder %s13, 0
      %p85 = por %p83, %p84
      %p86 = scmp.ne.s32.totalorder %s75, %s78
      %p87 = scmp.eq.s32.totalorder %s18, 1
      %p88 = por %p86, %p87
      %p89 = scmp.ne.s32.totalorder %s78, %s79
      %p90 = scmp.eq.s32.totalorder %s18, 0
      %p91 = por %p89, %p90
      %p92 = scmp.ne.s32.totalorder %s78, %s79
      %p93 = scmp.eq.s32.totalorder %s19, 1
      %p94 = por %p92, %p93
      %p96 = scmp.ne.s32.totalorder %s79, %s95
      %p97 = scmp.eq.s32.totalorder %s19, 0
      %p98 = por %p96, %p97
      %s99 = ssub.s32 %s13, %s20
      %p100 = scmp.eq.s32.totalorder %s99, 0
      %s102 = sadd.s32 %s101, 1
      %s103 = scalar_select %p100, %s101, %s102
      %p106 = pneg %p100
      %p107 = scmp.eq.s32.totalorder %s13, 1
      %p108 = por %p106, %p107
      %p109 = scmp.ne.s32.totalorder %s101, %s104
      %p110 = scmp.eq.s32.totalorder %s13, 0
      %p111 = por %p109, %p110
      %p112 = scmp.ne.s32.totalorder %s101, %s104
      %p113 = scmp.eq.s32.totalorder %s18, 1
      %p114 = por %p112, %p113
      %p115 = scmp.ne.s32.totalorder %s104, %s105
      %p116 = scmp.eq.s32.totalorder %s18, 0
      %p117 = por %p115, %p116
      %p118 = scmp.ne.s32.totalorder %s104, %s105
      %p119 = scmp.eq.s32.totalorder %s19, 1
      %p120 = por %p118, %p119
      %p122 = scmp.ne.s32.totalorder %s105, %s121
      %p123 = scmp.eq.s32.totalorder %s19, 0
      %p124 = por %p122, %p123
      %s125 = ssub.s32 %s13, %s20
      %p126 = scmp.eq.s32.totalorder %s125, 0
      %s128 = sadd.s32 %s127, 1
      %s129 = scalar_select %p126, %s127, %s128
      %p132 = pneg %p126
      %p133 = scmp.eq.s32.totalorder %s13, 1
      %p134 = por %p132, %p133
      %p135 = scmp.ne.s32.totalorder %s127, %s130
      %p136 = scmp.eq.s32.totalorder %s13, 0
      %p137 = por %p135, %p136
      %p138 = scmp.ne.s32.totalorder %s127, %s130
      %p139 = scmp.eq.s32.totalorder %s18, 1
      %p140 = por %p138, %p139
      %p141 = scmp.ne.s32.totalorder %s130, %s131
      %p142 = scmp.eq.s32.totalorder %s18, 0
      %p143 = por %p141, %p142
      %p144 = scmp.ne.s32.totalorder %s130, %s131
      %p145 = scmp.eq.s32.totalorder %s19, 1
      %p146 = por %p144, %p145
      %p148 = scmp.ne.s32.totalorder %s131, %s147
      %p149 = scmp.eq.s32.totalorder %s19, 0
      %p150 = por %p148, %p149
      %p151 = scmp.le.s32.totalorder 1, %s13
      %p152 = scmp.lt.s32.totalorder %s13, 3
      %p153 = pnand %p151, %p152
      %p154 = pneg %p153
      // Predicated region
      $region9: #{_criterion_device.1} parent=5 // pred_check
        _
      $region10: #{_criterion_device.1} parent=5 // pred_check_branch
        %156 = sbr.rel (%p153) target = $region12
      $region11: #{_criterion_device.1} parent=5 // pred_region
        %s157 = ssub.s32 %s13, 1
      $region12: #{_criterion_device.1} parent=5 // pred_fallthru
        _
      %p158 = scmp.lt.s32.totalorder %s13, 2
      // Predicated region
      $region13: #{_criterion_device.1} parent=5 // pred_check
        %p159 = pneg %p158
      $region14: #{_criterion_device.1} parent=5 // pred_check_branch
        %161 = sbr.rel (%p159) target = $region16
      $region15: #{_criterion_device.1} parent=5 // pred_region
        // Predicated region
        $region17: #{_criterion_device.1} parent=15 // pred_check
          %p162 = pneg %p33
        $region18: #{_criterion_device.1} parent=15 // pred_check_branch
          %164 = sbr.rel (%p162) target = $region20
        $region19: #{_criterion_device.1} parent=15 // pred_region
          %p165 = scmp.lt.s32.totalorder %s13, 1
          %s166 = scalar_select %p165, %s13, 1
          %s167 = smul.addr %s166, 8
          %s168 = scalar_lea.vmem %s0, %s167
        $region20: #{_criterion_device.1} parent=15 // pred_fallthru
          _
        // Predicated region
        $region21: #{_criterion_device.1} parent=15 // pred_check
          %p169 = pneg %p59
        $region22: #{_criterion_device.1} parent=15 // pred_check_branch
          %171 = sbr.rel (%p169) target = $region24
        $region23: #{_criterion_device.1} parent=15 // pred_region
          %p172 = scmp.lt.s32.totalorder %s13, 1
          %s173 = scalar_select %p172, %s13, 1
          %s174 = scalar_lea.vmem %s1, %s173
        $region24: #{_criterion_device.1} parent=15 // pred_fallthru
          _
        // Predicated region
        $region25: #{_criterion_device.1} parent=15 // pred_check
          %p175 = pneg %p85
        $region26: #{_criterion_device.1} parent=15 // pred_check_branch
          %177 = sbr.rel (%p175) target = $region28
        $region27: #{_criterion_device.1} parent=15 // pred_region
          %p178 = scmp.lt.s32.totalorder %s13, 1
          %s179 = scalar_select %p178, %s13, 1
          %s180 = smul.addr %s179, 8
          %s181 = scalar_lea.vmem %s2, %s180
        $region28: #{_criterion_device.1} parent=15 // pred_fallthru
          _
        // Predicated region
        $region29: #{_criterion_device.1} parent=15 // pred_check
          %p182 = pneg %p111
        $region30: #{_criterion_device.1} parent=15 // pred_check_branch
          %184 = sbr.rel (%p182) target = $region32
        $region31: #{_criterion_device.1} parent=15 // pred_region
          %s185 = sand.u32 %s101, 1
          %s186 = scalar_lea.sflag [#allocation4], %s185
          %s187 = sand.u32 %s101, 1
          %s188 = smul.addr %s187, 8
          %s189 = scalar_lea.vmem [#allocation3], %s188
          %191 = vsyncadd %s186, 0
          %s192 = smul.addr %s13, 8
          %s193 = scalar_lea.hbm %s3, %s192
          %s195 = sshll.u32 %s193, 4
          %s196 = int_to_ptr.hbm [resolvable:$true] %s195
          %s197 = sshll.u32 %s189, 4
          %s198 = int_to_ptr.vmem [resolvable:$true] %s197
          %200 = dma.hbm_to_vmem [thread:$0]  %s196, 128, %s198, %s186
        $region32: #{_criterion_device.1} parent=15 // pred_fallthru
          _
      $region16: #{_criterion_device.1} parent=5 // pred_fallthru
        _
      %p201 = scmp.le.s32.totalorder 1, %s13
      %p202 = scmp.lt.s32.totalorder %s13, 3
      %p203 = pnand %p201, %p202
      %p204 = pneg %p203
      // Predicated region
      $region33: #{_criterion_device.1} parent=5 // pred_check
        _
      $region34: #{_criterion_device.1} parent=5 // pred_check_branch
        %206 = sbr.rel (%p203) target = $region36
      $region35: #{_criterion_device.1} parent=5 // pred_region
        %s207 = ssub.s32 %s13, 1
        %s208 = sand.u32 %s104, 1
        %s209 = scalar_lea.sflag [#allocation4], %s208
        %s210 = sand.u32 %s104, 1
        %s211 = smul.addr %s210, 8
        %s212 = scalar_lea.vmem [#allocation3], %s211
        // Predicated region
        $region37: #{_criterion_device.1} parent=35 // pred_check
          %p213 = pneg %p117
        $region38: #{_criterion_device.1} parent=35 // pred_check_branch
          %215 = sbr.rel (%p213) target = $region40
        $region39: #{_criterion_device.1} parent=35 // pred_region
          %217 = dma.done %s209, 128
        $region40: #{_criterion_device.1} parent=35 // pred_fallthru
          _
        %p218 = scmp.lt.s32.totalorder %s18, 1
        %s219 = scalar_select %p218, %s18, 1
        %s220 = smul.addr %s219, 8
        %s221 = scalar_lea.vmem %s0, %s220
        %p222 = pneg %p39
        %p223 = pneg %p36
        %p224 = scmp.lt.s32.totalorder %s18, 1
        %s225 = scalar_select %p224, %s18, 1
        %s226 = scalar_lea.vmem %s1, %s225
        %p227 = pneg %p65
        %p228 = pneg %p62
        %p229 = scmp.lt.s32.totalorder %s18, 1
        %s230 = scalar_select %p229, %s18, 1
        %s231 = smul.addr %s230, 8
        %s232 = scalar_lea.vmem %s2, %s231
        %p233 = pneg %p91
        %p234 = pneg %p88
        %s235 = sand.u32 %s104, 1
        %s236 = scalar_lea.sflag [#allocation4], %s235
        %s237 = sand.u32 %s104, 1
        %s238 = smul.addr %s237, 8
        %s239 = scalar_lea.vmem [#allocation3], %s238
        %p240 = pneg %p117
        %p241 = pneg %p114
        %p242 = pneg %p143
        %p243 = pneg %p140
        %p244 = scmp.lt.s32.totalorder %s18, 1
        %s245 = scalar_select %p244, %s18, 1
        %s246 = scalar_lea.vmem %s4, %s245
        %p247 = scmp.lt.s32.totalorder %s18, 1
        %s248 = scalar_select %p247, %s18, 1
        %s249 = smul.addr %s248, 8
        %s250 = scalar_lea.vmem %s0, %s249
        %p251 = scmp.lt.s32.totalorder %s18, 1
        %s252 = scalar_select %p251, %s18, 1
        %s253 = scalar_lea.vmem %s1, %s252
        %p254 = scmp.lt.s32.totalorder %s18, 1
        %s255 = scalar_select %p254, %s18, 1
        %s256 = smul.addr %s255, 8
        %s257 = scalar_lea.vmem %s2, %s256
        %p258 = scmp.lt.s32.totalorder %s18, 1
        %s259 = scalar_select %p258, %s18, 1
        %s260 = scalar_lea.vmem %s4, %s259
        %v261 = vld [vmem:[%s250] sm:$0x1f]
        %v262 = vld [vmem:[%s253] sm:$0x1]
        %vm263 = vcmp.ne.s32.totalorder %v262, 4
        %v264 = vsel %vm263, 1, 0
        %v265 = vcvt.s32.f32 %v264
        %vm266 = vcmask 125952
        %v267 = vsel %vm266, %v261, -inf
        %v268 = vrot.slane %v267, 4
        %v269 = vmax.f32 %v267, %v268
        %v270 = vrot.slane %v269, 2
        %v271 = vmax.f32 %v269, %v270
        %v272 = vrot.slane %v271, 1
        %v273 = vmax.f32 %v271, %v272
        %v274 = vmax.f32 %v273, %v261
        %v275 = vperm.slane %v274, 4
        %v276 = vsub.f32 %v261, %v275
        %v277 = vmul.f32 %v276, 1.442695
        %v278 = vpow.pop %v277
        %vm279 = vcmask 126976
        %v280 = vsel %vm279, %v278, 0.0
        %v281 = vrot.slane %v280, 4
        %v282 = vadd.f32 %v280, %v281
        %v283 = vrot.slane %v282, 2
        %v284 = vadd.f32 %v282, %v283
        %v285 = vrot.slane %v284, 1
        %v286 = vadd.f32 %v284, %v285
        %v287 = vlog2.pop %v286
        %v288 = vmul.f32 %v287, 0.6931472
        %v289 = vlaneseq
        %v290 = vshrl.u32 %v289, 7
        %v291 = vperm.slane %v262, 0
        %vm292 = vcmp.eq.s32.totalorder %v290, %v291
        %v293 = vsel %vm292, %v276, 0.0
        %v294 = vsel %vm279, %v293, 0.0
        %v295 = vrot.slane %v294, 4
        %v296 = vadd.f32 %v294, %v295
        %v297 = vrot.slane %v296, 2
        %v298 = vadd.f32 %v296, %v297
        %v299 = vrot.slane %v298, 1
        %v300 = vadd.f32 %v298, %v299
        %v301 = vsub.f32 %v288, %v300
        %vm302 = vcmp.ge.f32.partialorder %v273, %v261
        %v303 = vsel %vm302, 1, 0
        %v304 = vcvt.s32.f32 %v303
        %v305 = vld [vmem:[%s257] sm:$0xff]
        %v306 = vld [vmem:[%s212] sm:$0xff]
        %v307 = vsub.f32 %v305, %v306
        %v308 = vand.u32 2147483647, %v307
        %v310 = vperm.slane %v265, 0
        %v312 = vmul.f32 %v308, %v310
        %vm313 = vcmask 122880
        %314 = vst.msk [vmem:[#allocation2] sm:$0x1] %vm313, %v301
        %315 = vst.msk [vmem:[#allocation2 + $0x1] sm:$0x1] %vm313, 1.0
        %vm316 = vcmask 126980
        %317 = vst.msk [vmem:[#allocation2 - $0x2] sm:$0x10] %vm316, %v304
        %318 = vst.msk [vmem:[#allocation2 + $0x3] sm:$0x1] %vm313, %v265
        %vm319 = vcmask 130048
        %320 = vst.msk [vmem:[#allocation2 + $0x4] sm:$0xff] %vm319, %v312
        %v321 = vld [vmem:[#allocation2] sm:$0xff]
        %v322 = vld [vmem:[#allocation2 + $0x8] sm:$0xf]
        %v323 = vsel %vm319, %v321, 0.0
        %324 = vadd.xlane.f32.xlu0 %v323
        %v325 = vpop.xlane.xlu0 %324
        %v326 = vsel %vm266, %v322, 0.0
        %327 = vadd.xlane.f32.xlu0 %v326
        %v328 = vpop.xlane.xlu0 %327
        %v329 = vlaneseq
        %v330 = vand.u32 %v329, 127
        %vm331 = vcmp.eq.s32.totalorder %v330, 0
        %v332 = vsel %vm331, %v325, 0.0
        %v333 = vadd.f32 %v332, 0.0
        %vm334 = vcmp.eq.s32.totalorder %v330, 1
        %v335 = vsel %vm334, %v325, 0.0
        %v337 = vrot.slane %v335, 1
        %v339 = vadd.f32 %v333, %v337
        %vm340 = vcmp.eq.s32.totalorder %v330, 2
        %v341 = vsel %vm340, %v325, 0.0
        %v343 = vrot.slane %v341, 2
        %v345 = vadd.f32 %v339, %v343
        %vm346 = vcmp.eq.s32.totalorder %v330, 3
        %v347 = vsel %vm346, %v325, 0.0
        %v349 = vrot.slane %v347, 3
        %v351 = vadd.f32 %v345, %v349
        %vm352 = vcmp.eq.s32.totalorder %v330, 4
        %v353 = vsel %vm352, %v325, 0.0
        %v355 = vrot.slane %v353, 4
        %v357 = vadd.f32 %v351, %v355
        %vm358 = vcmp.eq.s32.totalorder %v330, 5
        %v359 = vsel %vm358, %v325, 0.0
        %v361 = vrot.slane %v359, 5
        %v363 = vadd.f32 %v357, %v361
        %vm364 = vcmp.eq.s32.totalorder %v330, 6
        %v365 = vsel %vm364, %v325, 0.0
        %v367 = vrot.slane %v365, 6
        %v369 = vadd.f32 %v363, %v367
        %vm370 = vcmp.eq.s32.totalorder %v330, 7
        %v371 = vsel %vm370, %v325, 0.0
        %v373 = vrot.slane %v371, 7
        %v375 = vadd.f32 %v369, %v373
        %vm376 = vcmp.eq.s32.totalorder %v330, 8
        %v377 = vsel %vm376, %v328, 0.0
        %v378 = vadd.f32 %v375, %v377
        %vm379 = vcmp.eq.s32.totalorder %v330, 9
        %v380 = vsel %vm379, %v328, 0.0
        %v382 = vrot.slane %v380, 1
        %v384 = vadd.f32 %v378, %v382
        %vm385 = vcmp.eq.s32.totalorder %v330, 10
        %v386 = vsel %vm385, %v328, 0.0
        %v388 = vrot.slane %v386, 2
        %v390 = vadd.f32 %v384, %v388
        %vm391 = vcmp.eq.s32.totalorder %v330, 11
        %v392 = vsel %vm391, %v328, 0.0
        %v394 = vrot.slane %v392, 3
        %v396 = vadd.f32 %v390, %v394
        %397 = vst [vmem:[%s260] sm:$0x1] %v396
        %p398 = scmp.lt.s32.totalorder %s18, 1
        %s399 = scalar_select %p398, %s18, 1
        %s400 = scalar_lea.vmem %s4, %s399
        // Predicated region
        $region41: #{_criterion_device.1} parent=35 // pred_check
          %p401 = pneg %p140
        $region42: #{_criterion_device.1} parent=35 // pred_check_branch
          %403 = sbr.rel (%p401) target = $region44
        $region43: #{_criterion_device.1} parent=35 // pred_region
          _
        $region44: #{_criterion_device.1} parent=35 // pred_fallthru
          _
      $region36: #{_criterion_device.1} parent=5 // pred_fallthru
        _
      %p404 = scmp.le.s32.totalorder 2, %s13
      // Predicated region
      $region45: #{_criterion_device.1} parent=5 // pred_check
        %p405 = pneg %p404
      $region46: #{_criterion_device.1} parent=5 // pred_check_branch
        %407 = sbr.rel (%p405) target = $region48
      $region47: #{_criterion_device.1} parent=5 // pred_region
        %s408 = ssub.s32 %s13, 2
        // Predicated region
        $region49: #{_criterion_device.1} parent=47 // pred_check
          %p409 = pneg %p146
        $region50: #{_criterion_device.1} parent=47 // pred_check_branch
          %411 = sbr.rel (%p409) target = $region52
        $region51: #{_criterion_device.1} parent=47 // pred_region
          %p412 = scmp.lt.s32.totalorder %s19, 1
          %s413 = scalar_select %p412, %s19, 1
          %s414 = scalar_lea.vmem %s4, %s413
        $region52: #{_criterion_device.1} parent=47 // pred_fallthru
          _
      $region48: #{_criterion_device.1} parent=5 // pred_fallthru
        _
    $region6: #{_criterion_device.1} parent=1 // loop_footer
      %s17 = sadd.s32 1, %s13
    $region7: #{_criterion_device.1} parent=1 // loop_footer_branch
      %12 = sbr.rel target = $region3
    $region8: #{_criterion_device.1} parent=1 // loop_exit
      _
    %415 = vsyncpa [#allocation4], 1
    %s416 = scalar_lea.sflag [#allocation4], 1
    %417 = vsyncpa %s416, 1

</llo_original>
